<compile_context>
chip_gen: v5e
topology: v5e:2x2
jax: 0.10.0
libtpu: 0.0.40
codegen_flags: <defaults>
</compile_context>

<pallas_src>
import functools

import jax
import jax.numpy as jnp
from jax.experimental import pallas as pl
from jax.experimental.pallas import tpu as pltpu

_EPS = 1e-5   # nn.BatchNorm2d default eps


# ------------------------------ fused kernel --------------------------------

def _preact_block_kernel(x_ref, spre_ref, bpre_ref, t1_ref, b1_ref, t2_ref,
                         o_ref, *, preactivate, img_rows):
    # x_ref:   (M, W*Cin)   lane-dense row stack of NB images (M = NB * H)
    # t1_ref:  (3*W*Cin, W*Cout)  stacked block-Toeplitz conv1 weights (bn1_2 scale folded)
    # t2_ref:  (3*W*Cout, W*Cout) stacked block-Toeplitz conv2 weights
    # spre/bpre/b1: (1, W*C) per-channel params tiled over W (f32)
    M, WC = x_ref.shape
    H = img_rows
    cdt = t1_ref.dtype

    xf = x_ref[...].astype(jnp.float32)                     # (M, W*Cin)
    if preactivate:
        pre = jnp.maximum(xf * spre_ref[...] + bpre_ref[...], 0.0)
    else:
        pre = xf

    # Row index within each image: masks the rolled halo rows (top/bottom row
    # of every image in the stack) to implement the pad=1 zero boundary along H.
    row = jax.lax.broadcasted_iota(jnp.int32, (M, WC), 0) % H
    top = row == 0
    bot = row == H - 1

    def conv3x3(act_f32, t_ref):
        # One dense MXU matmul per conv: the 3 ky taps are fused by
        # concatenating the +/-1-row-shifted activations along the lane dim.
        up = jnp.where(top, 0.0, pltpu.roll(act_f32, shift=1, axis=0))      # act[r-1]
        dn = jnp.where(bot, 0.0, pltpu.roll(act_f32, shift=M - 1, axis=0))  # act[r+1]
        lhs = jnp.concatenate([up, act_f32, dn], axis=-1).astype(cdt)       # (M, 3*WC)
        return jnp.dot(lhs, t_ref[...], preferred_element_type=jnp.float32)

    # conv1 (3x3, pad 1, stride 1) + folded-BN bias + relu
    mid = jnp.maximum(conv3x3(pre, t1_ref) + b1_ref[...], 0.0)
    # conv2 (3x3, pad 1) + residual (original x; re-read to keep live ranges short)
    o_ref[...] = (conv3x3(mid, t2_ref) + x_ref[...].astype(jnp.float32)).astype(o_ref.dtype)


# ------------------------------ helpers --------------------------------------

def _fold_bn(gamma, beta, mean, var):
    scale = gamma / jnp.sqrt(var + _EPS)
    bias = beta - mean * scale
    return scale.astype(jnp.float32), bias.astype(jnp.float32)


def _toeplitz_conv_weights(w_hwio, width):
    """(3,3,Cin,Cout) HWIO 3x3 weights -> (3*width*Cin, width*Cout).

    Row block ky implements the three kx taps and the pad-1 zero boundary
    along W as one dense matmul: out_row = sum_ky x_row(h+ky-1) @ T[ky].
    The three ky blocks are stacked along the contraction dim so the whole
    conv is a single K = 3*width*Cin matmul.
    """
    # TODO(synk): for layers with Cin >= ~64 the dense Toeplitz trick inflates
    # MXU work by ~width/3; switch to a direct per-kx formulation (contraction
    # over Cin) there, especially on v5e's lower MXU roofline.
    mats = []
    for ky in range(3):
        t = None
        for kx in range(3):
            shift = jnp.eye(width, k=1 - kx, dtype=jnp.float32)   # src col = j + kx - 1
            blk = jnp.kron(shift, w_hwio[ky, kx].astype(jnp.float32))
            t = blk if t is None else t + blk
        mats.append(t)
    return jnp.concatenate(mats, axis=0)


def _pick_images_per_step(n, h, target_rows=128):
    """Largest divisor of n whose row block is sublane-aligned and ~target_rows.

    Caps M per matmul at ~128 rows (vreg pressure) while giving the MXU enough
    rows to amortize fill/drain and the per-grid-step overhead.
    """
    cands = [nb for nb in range(1, n + 1)
             if n % nb == 0 and (nb * h) % 8 == 0 and nb * h <= max(target_rows, h)]
    return max(cands) if cands else n


# ------------------------------ block forward --------------------------------

def preact_block_forward(x_nchw, params, *, stride=1, preactivate=True,
                         compute_dtype=jnp.float32, images_per_step=None):
    """PreActBlock forward. x_nchw: (N, C, H, W) like the PyTorch module."""
    if stride != 1:
        # TODO(synk): stride>1 needs the downsample branch (1x1 strided conv on
        # preact); downsample is None in this configuration, so unsupported.
        raise NotImplementedError("stride != 1 (downsample path) not implemented")

    # TODO(synk): when chaining blocks, keep activations in the lane-dense
    # (N*H, W*C) layout between pallas_calls instead of transposing
    # NCHW<->NHWC around every block (each transpose is an extra HBM pass).
    x = jnp.transpose(x_nchw, (0, 2, 3, 1))                 # NCHW -> NHWC
    N, H, W, C = x.shape

    w1 = jnp.transpose(params["conv1_w"], (2, 3, 1, 0))     # OIHW -> HWIO
    w2 = jnp.transpose(params["conv2_w"], (2, 3, 1, 0))
    Cout = w1.shape[-1]
    assert Cout == C and w2.shape[-1] == C, "downsample=None requires inplanes == planes"

    if preactivate:
        s_pre, b_pre = _fold_bn(*params["pre_bn"])
    else:
        s_pre = jnp.ones((C,), jnp.float32)
        b_pre = jnp.zeros((C,), jnp.float32)
    s1, b1 = _fold_bn(*params["bn1_2"])

    # Fold bn1_2's per-channel scale into conv1's weights (bias+relu stay in-kernel).
    w1_folded = w1 * s1[None, None, None, :]

    wc_in, wc_out = W * C, W * Cout
    t1 = _toeplitz_conv_weights(w1_folded, W).astype(compute_dtype)   # (3*W*C, W*Cout)
    t2 = _toeplitz_conv_weights(w2, W).astype(compute_dtype)          # (3*W*Cout, W*Cout)

    spre_t = jnp.tile(s_pre, W).reshape(1, wc_in)            # f32, tiled over W
    bpre_t = jnp.tile(b_pre, W).reshape(1, wc_in)
    b1_t = jnp.tile(b1, W).reshape(1, wc_out)

    nb = images_per_step if images_per_step is not None else _pick_images_per_step(N, H)
    assert N % nb == 0
    m = nb * H
    grid = (N // nb,)

    x_rows = x.reshape(N * H, wc_in).astype(compute_dtype)   # lane-dense row stack

    isz = jnp.dtype(compute_dtype).itemsize
    # Executed MXU work (dense Toeplitz: K = 3*W*Cin per conv), plus params.
    flops = 2 * N * H * (3 * wc_in * wc_out + 3 * wc_out * wc_out)
    bytes_accessed = (N * H * (wc_in + wc_out)) * isz \
        + (t1.size + t2.size) * isz \
        + (spre_t.size + bpre_t.size + b1_t.size) * 4
    cost = pl.CostEstimate(flops=int(flops), transcendentals=0,
                           bytes_accessed=int(bytes_accessed))

    # VMEM footprint: double-buffered activation blocks + (default-double-buffered)
    # resident weights/params, with headroom for compiler scratch.
    # TODO(synk): at large W*C mark the resident weight inputs
    # pipeline_mode=pl.Buffered(1) so T1/T2 are single-buffered (v7x has only
    # 64 MiB physical VMEM and T scales as (W*C)^2).
    act_bytes = 2 * 2 * m * (wc_in + wc_out) * isz
    wgt_bytes = 2 * (t1.size + t2.size) * isz + 2 * (spre_t.size + bpre_t.size + b1_t.size) * 4
    vmem_limit = int(min(128 << 20, max(32 << 20, act_bytes + wgt_bytes + (8 << 20))))

    kernel = functools.partial(_preact_block_kernel, preactivate=preactivate, img_rows=H)
    out_rows = pl.pallas_call(
        kernel,
        out_shape=jax.ShapeDtypeStruct((N * H, wc_out), compute_dtype),
        grid=grid,
        in_specs=[
            pl.BlockSpec((m, wc_in), lambda n: (n, 0)),              # x rows (per image group)
            pl.BlockSpec((1, wc_in), lambda n: (0, 0)),              # pre-BN scale (resident)
            pl.BlockSpec((1, wc_in), lambda n: (0, 0)),              # pre-BN bias
            pl.BlockSpec((3 * wc_in, wc_out), lambda n: (0, 0)),     # T1 (resident)
            pl.BlockSpec((1, wc_out), lambda n: (0, 0)),             # bn1_2 bias
            pl.BlockSpec((3 * wc_out, wc_out), lambda n: (0, 0)),    # T2 (resident)
        ],
        out_specs=pl.BlockSpec((m, wc_out), lambda n: (n, 0)),
        compiler_params=pltpu.CompilerParams(
            dimension_semantics=("parallel",),
            vmem_limit_bytes=vmem_limit),
        cost_estimate=cost,
        # TODO(synk): for stem-scale H (and small N) add a row-band grid axis
        # with halo-overlapped blocks so v7x's two TensorCores get many
        # pipelined steps per image.
    )(x_rows, spre_t, bpre_t, t1, b1_t, t2)

    out = out_rows.reshape(N, H, W, Cout)
    return jnp.transpose(out, (0, 3, 1, 2))                   # back to NCHW


# ------------------------------ pure-JAX reference ---------------------------

def _ref_forward(x_nchw, params, *, stride=1):
    x = jnp.transpose(x_nchw, (0, 2, 3, 1))
    dn = ("NHWC", "HWIO", "NHWC")
    s_pre, b_pre = _fold_bn(*params["pre_bn"])
    preact = jnp.maximum(x * s_pre + b_pre, 0.0)
    w1 = jnp.transpose(params["conv1_w"], (2, 3, 1, 0))
    w2 = jnp.transpose(params["conv2_w"], (2, 3, 1, 0))
    out = jax.lax.conv_general_dilated(preact, w1, (stride, stride),
                                       [(1, 1), (1, 1)], dimension_numbers=dn)
    s1, b1 = _fold_bn(*params["bn1_2"])
    out = jnp.maximum(out * s1 + b1, 0.0)
    out = jax.lax.conv_general_dilated(out, w2, (1, 1), [(1, 1), (1, 1)],
                                       dimension_numbers=dn)
    out = out + x
    return jnp.transpose(out, (0, 3, 1, 2))


# ----------------------------------- main ------------------------------------

if __name__ == "__main__":
    key = jax.random.PRNGKey(0)
    ks = jax.random.split(key, 11)

    # Small shapes consistent with the module (downsample=None -> inplanes==planes).
    # W * C = 128 so the kernel's minor dim is exactly one full lane tile.
    N, C, H, W = 2, 8, 16, 16
    inplanes = planes = C
    stride = 1

    x = jax.random.normal(ks[0], (N, C, H, W), jnp.float32)

    params = {
        # nn.Conv2d weights are (out, in, kH, kW)
        "conv1_w": 0.1 * jax.random.normal(ks[1], (planes, inplanes, 3, 3), jnp.float32),
        "conv2_w": 0.1 * jax.random.normal(ks[2], (planes, planes, 3, 3), jnp.float32),
        # BatchNorm params: (gamma, beta, running_mean, running_var)
        "pre_bn": (
            1.0 + 0.1 * jax.random.normal(ks[3], (inplanes,), jnp.float32),
            0.1 * jax.random.normal(ks[4], (inplanes,), jnp.float32),
            0.1 * jax.random.normal(ks[5], (inplanes,), jnp.float32),
            jax.random.uniform(ks[6], (inplanes,), jnp.float32, 0.5, 1.5),
        ),
        "bn1_2": (
            1.0 + 0.1 * jax.random.normal(ks[7], (planes,), jnp.float32),
            0.1 * jax.random.normal(ks[8], (planes,), jnp.float32),
            0.1 * jax.random.normal(ks[9], (planes,), jnp.float32),
            jax.random.uniform(ks[10], (planes,), jnp.float32, 0.5, 1.5),
        ),
    }

    ref = jax.block_until_ready(_ref_forward(x, params, stride=stride))

    # f32 path: tight check against the XLA reference.
    out = jax.block_until_ready(
        preact_block_forward(x, params, stride=stride, preactivate=True))
    assert out.shape == (N, planes, H, W), out.shape
    assert jnp.allclose(out, ref, rtol=1e-4, atol=1e-4), float(jnp.max(jnp.abs(out - ref)))

    # bf16 activations/weights (f32 accumulation): halves HBM traffic, bf16 MXU.
    # Note: x is quantized to bf16 at the kernel boundary, so the residual add
    # also uses bf16-rounded x -> loose tolerance.
    out_bf16 = jax.block_until_ready(
        preact_block_forward(x, params, stride=stride, preactivate=True,
                             compute_dtype=jnp.bfloat16)).astype(jnp.float32)
    assert jnp.allclose(out_bf16, ref, rtol=5e-2, atol=2e-1), \
        float(jnp.max(jnp.abs(out_bf16 - ref)))

    print("KERNEL_OK")
</pallas_src>

<mosaic_0001>
module attributes {stable_mosaic.version = 11 : i64} {
  func.func @_preact_block_kernel(%arg0: i32, %arg1: memref<32x128xf32, #tpu.memory_space<vmem>>, %arg2: memref<1x128xf32, #tpu.memory_space<vmem>>, %arg3: memref<1x128xf32, #tpu.memory_space<vmem>>, %arg4: memref<384x128xf32, #tpu.memory_space<vmem>>, %arg5: memref<1x128xf32, #tpu.memory_space<vmem>>, %arg6: memref<384x128xf32, #tpu.memory_space<vmem>>, %arg7: memref<32x128xf32, #tpu.memory_space<vmem>>) attributes {dimension_semantics = [#tpu.dimension_semantics<parallel>], iteration_bounds = array<i64: 1>, scalar_prefetch = 0 : i64, scratch_operands = 0 : i64, tpu.core_type = #tpu.core_type<tc>, window_params = [{transform_indices = @transform_0, window_bounds = array<i64: 32, 128>}, {pipeline_mode = #tpu.pipeline_mode<synchronous>, transform_indices = @transform_1, window_bounds = array<i64: 1, 128>}, {pipeline_mode = #tpu.pipeline_mode<synchronous>, transform_indices = @transform_2, window_bounds = array<i64: 1, 128>}, {pipeline_mode = #tpu.pipeline_mode<synchronous>, transform_indices = @transform_3, window_bounds = array<i64: 384, 128>}, {pipeline_mode = #tpu.pipeline_mode<synchronous>, transform_indices = @transform_4, window_bounds = array<i64: 1, 128>}, {pipeline_mode = #tpu.pipeline_mode<synchronous>, transform_indices = @transform_5, window_bounds = array<i64: 384, 128>}, {transform_indices = @transform_6, window_bounds = array<i64: 32, 128>}]} {
    %c0 = arith.constant 0 : index
    %c0_0 = arith.constant 0 : index
    %0 = vector.load %arg1[%c0, %c0_0] : memref<32x128xf32, #tpu.memory_space<vmem>>, vector<32x128xf32>
    %c0_1 = arith.constant 0 : index
    %c0_2 = arith.constant 0 : index
    %1 = vector.load %arg2[%c0_1, %c0_2] : memref<1x128xf32, #tpu.memory_space<vmem>>, vector<1x128xf32>
    %2 = vector.broadcast %1 : vector<1x128xf32> to vector<32x128xf32>
    %3 = arith.mulf %0, %2 : vector<32x128xf32>
    %c0_3 = arith.constant 0 : index
    %c0_4 = arith.constant 0 : index
    %4 = vector.load %arg3[%c0_3, %c0_4] : memref<1x128xf32, #tpu.memory_space<vmem>>, vector<1x128xf32>
    %5 = vector.broadcast %4 : vector<1x128xf32> to vector<32x128xf32>
    %6 = arith.addf %3, %5 : vector<32x128xf32>
    %cst = arith.constant 0.000000e+00 : f32
    %7 = vector.broadcast %cst : f32 to vector<32x128xf32>
    %8 = arith.maximumf %6, %7 : vector<32x128xf32>
    %9 = tpu.iota {dimensions = array<i32: 0>} : vector<32x128xi32>
    %c16_i32 = arith.constant 16 : i32
    %c0_i32 = arith.constant 0 : i32
    %10 = arith.cmpi eq, %c16_i32, %c0_i32 : i32
    %c1_i32 = arith.constant 1 : i32
    %11 = arith.select %10, %c1_i32, %c16_i32 : i32
    %12 = vector.broadcast %11 : i32 to vector<32x128xi32>
    %13 = arith.remsi %9, %12 : vector<32x128xi32>
    %c0_i32_5 = arith.constant 0 : i32
    %14 = vector.broadcast %c0_i32_5 : i32 to vector<32x128xi32>
    %15 = arith.cmpi ne, %13, %14 : vector<32x128xi32>
    %c0_i32_6 = arith.constant 0 : i32
    %16 = vector.broadcast %c0_i32_6 : i32 to vector<32x128xi32>
    %17 = arith.cmpi slt, %13, %16 : vector<32x128xi32>
    %c0_i32_7 = arith.constant 0 : i32
    %18 = arith.cmpi slt, %11, %c0_i32_7 : i32
    %19 = vector.broadcast %18 : i1 to vector<32x128xi1>
    %20 = vector.broadcast %19 : vector<32x128xi1> to vector<32x128xi1>
    %21 = arith.xori %17, %20 : vector<32x128xi1>
    %22 = arith.andi %21, %15 : vector<32x128xi1>
    %23 = vector.broadcast %11 : i32 to vector<32x128xi32>
    %24 = arith.addi %13, %23 : vector<32x128xi32>
    %25 = arith.select %22, %24, %13 : vector<32x128xi1>, vector<32x128xi32>
    %c0_i32_8 = arith.constant 0 : i32
    %26 = vector.broadcast %c0_i32_8 : i32 to vector<32x128xi32>
    %27 = arith.cmpi eq, %25, %26 : vector<32x128xi32>
    %c15_i32 = arith.constant 15 : i32
    %28 = vector.broadcast %c15_i32 : i32 to vector<32x128xi32>
    %29 = arith.cmpi eq, %25, %28 : vector<32x128xi32>
    %c1_i32_9 = arith.constant 1 : i32
    %30 = tpu.dynamic_rotate %8 by %c1_i32_9 dim 0 : vector<32x128xf32>, i32 -> vector<32x128xf32>
    %cst_10 = arith.constant 0.000000e+00 : f32
    %31 = vector.broadcast %cst_10 : f32 to vector<32x128xf32>
    %32 = arith.select %27, %31, %30 : vector<32x128xi1>, vector<32x128xf32>
    %c31_i32 = arith.constant 31 : i32
    %33 = tpu.dynamic_rotate %8 by %c31_i32 dim 0 : vector<32x128xf32>, i32 -> vector<32x128xf32>
    %cst_11 = arith.constant 0.000000e+00 : f32
    %34 = vector.broadcast %cst_11 : f32 to vector<32x128xf32>
    %35 = arith.select %29, %34, %33 : vector<32x128xi1>, vector<32x128xf32>
    %36 = tpu.concatenate %32, %8, %35 in 1 : vector<32x128xf32>, vector<32x128xf32>, vector<32x128xf32> -> vector<32x384xf32>
    %c0_12 = arith.constant 0 : index
    %c0_13 = arith.constant 0 : index
    %37 = vector.load %arg4[%c0_12, %c0_13] : memref<384x128xf32, #tpu.memory_space<vmem>>, vector<384x128xf32>
    %cst_14 = arith.constant dense<0.000000e+00> : vector<32x128xf32>
    %38 = tpu.matmul %36, %37, %cst_14 {dimension_numbers = #tpu.dot_dimension_numbers<[1], [0], [0], [1], [0, 0, 1, 1], [], []>} : vector<32x384xf32>, vector<384x128xf32>, vector<32x128xf32> -> vector<32x128xf32>
    %c0_15 = arith.constant 0 : index
    %c0_16 = arith.constant 0 : index
    %39 = vector.load %arg5[%c0_15, %c0_16] : memref<1x128xf32, #tpu.memory_space<vmem>>, vector<1x128xf32>
    %40 = vector.broadcast %39 : vector<1x128xf32> to vector<32x128xf32>
    %41 = arith.addf %38, %40 : vector<32x128xf32>
    %cst_17 = arith.constant 0.000000e+00 : f32
    %42 = vector.broadcast %cst_17 : f32 to vector<32x128xf32>
    %43 = arith.maximumf %41, %42 : vector<32x128xf32>
    %c1_i32_18 = arith.constant 1 : i32
    %44 = tpu.dynamic_rotate %43 by %c1_i32_18 dim 0 : vector<32x128xf32>, i32 -> vector<32x128xf32>
    %cst_19 = arith.constant 0.000000e+00 : f32
    %45 = vector.broadcast %cst_19 : f32 to vector<32x128xf32>
    %46 = arith.select %27, %45, %44 : vector<32x128xi1>, vector<32x128xf32>
    %c31_i32_20 = arith.constant 31 : i32
    %47 = tpu.dynamic_rotate %43 by %c31_i32_20 dim 0 : vector<32x128xf32>, i32 -> vector<32x128xf32>
    %cst_21 = arith.constant 0.000000e+00 : f32
    %48 = vector.broadcast %cst_21 : f32 to vector<32x128xf32>
    %49 = arith.select %29, %48, %47 : vector<32x128xi1>, vector<32x128xf32>
    %50 = tpu.concatenate %46, %43, %49 in 1 : vector<32x128xf32>, vector<32x128xf32>, vector<32x128xf32> -> vector<32x384xf32>
    %c0_22 = arith.constant 0 : index
    %c0_23 = arith.constant 0 : index
    %51 = vector.load %arg6[%c0_22, %c0_23] : memref<384x128xf32, #tpu.memory_space<vmem>>, vector<384x128xf32>
    %cst_24 = arith.constant dense<0.000000e+00> : vector<32x128xf32>
    %52 = tpu.matmul %50, %51, %cst_24 {dimension_numbers = #tpu.dot_dimension_numbers<[1], [0], [0], [1], [0, 0, 1, 1], [], []>} : vector<32x384xf32>, vector<384x128xf32>, vector<32x128xf32> -> vector<32x128xf32>
    %c0_25 = arith.constant 0 : index
    %c0_26 = arith.constant 0 : index
    %53 = vector.load %arg1[%c0_25, %c0_26] : memref<32x128xf32, #tpu.memory_space<vmem>>, vector<32x128xf32>
    %54 = arith.addf %52, %53 : vector<32x128xf32>
    %c0_27 = arith.constant 0 : index
    %c0_28 = arith.constant 0 : index
    %55 = vector.load %arg7[%c0_27, %c0_28] : memref<32x128xf32, #tpu.memory_space<vmem>>, vector<32x128xf32>
    tpu.vector_store %arg7[%c0_27, %c0_28], %54 {strides = array<i32>} : memref<32x128xf32, #tpu.memory_space<vmem>>, vector<32x128xf32>,
    return
  }
  func.func @transform_0(%arg0: i32) -> (i32, i32) {
    %c0_i32 = arith.constant 0 : i32
    %c0_i32_0 = arith.constant 0 : i32
    return %arg0, %c0_i32 : i32, i32
  }
  func.func @transform_1(%arg0: i32) -> (i32, i32) {
    %c0_i32 = arith.constant 0 : i32
    %c0_i32_0 = arith.constant 0 : i32
    %c0_i32_1 = arith.constant 0 : i32
    return %c0_i32, %c0_i32_0 : i32, i32
  }
  func.func @transform_2(%arg0: i32) -> (i32, i32) {
    %c0_i32 = arith.constant 0 : i32
    %c0_i32_0 = arith.constant 0 : i32
    %c0_i32_1 = arith.constant 0 : i32
    return %c0_i32, %c0_i32_0 : i32, i32
  }
  func.func @transform_3(%arg0: i32) -> (i32, i32) {
    %c0_i32 = arith.constant 0 : i32
    %c0_i32_0 = arith.constant 0 : i32
    %c0_i32_1 = arith.constant 0 : i32
    return %c0_i32, %c0_i32_0 : i32, i32
  }
  func.func @transform_4(%arg0: i32) -> (i32, i32) {
    %c0_i32 = arith.constant 0 : i32
    %c0_i32_0 = arith.constant 0 : i32
    %c0_i32_1 = arith.constant 0 : i32
    return %c0_i32, %c0_i32_0 : i32, i32
  }
  func.func @transform_5(%arg0: i32) -> (i32, i32) {
    %c0_i32 = arith.constant 0 : i32
    %c0_i32_0 = arith.constant 0 : i32
    %c0_i32_1 = arith.constant 0 : i32
    return %c0_i32, %c0_i32_0 : i32, i32
  }
  func.func @transform_6(%arg0: i32) -> (i32, i32) {
    %c0_i32 = arith.constant 0 : i32
    %c0_i32_0 = arith.constant 0 : i32
    return %arg0, %c0_i32 : i32, i32
  }
}

</mosaic_0001>

<llo_original>
// kernel: tpu_custom_call.1
$region0: #{tpu_custom_call.1}
  #allocation0 [shape = 'u32[]', space=smem, size = 0x4, offset = 0x4, fixed_abs, tag = 'smem constant byte address 0x4 - core index']
  #allocation1 [shape = 'u32[72,128]{1,0:T(1,128)}', space=vmem, size = 0x9000, scoped, tag = 'internal scratch']
  %s0 = inlined_call_operand.hbm [shape: f32[32,128], index: 0, kind: input, shape index: {}]
  %s1 = inlined_call_operand.hbm [shape: f32[1,128], index: 1, kind: input, shape index: {}]
  %s2 = inlined_call_operand.vmem [shape: f32[1,128], index: 2, kind: input, shape index: {}]
  %s3 = inlined_call_operand.hbm [shape: f32[384,128], index: 3, kind: input, shape index: {}]
  %s4 = inlined_call_operand.vmem [shape: f32[1,128], index: 4, kind: input, shape index: {}]
  %s5 = inlined_call_operand.hbm [shape: f32[384,128], index: 5, kind: input, shape index: {}]
  %s6 = inlined_call_operand.hbm [shape: f32[32,128], index: 6, kind: output, shape index: {}]
  %s7 = sld [smem:[#allocation0]]
  $region50: #{tpu_custom_call.1} parent=0
    _
  %s9 = ssub.s32 1, %s7
  %s10 = scalar_select 0, %s9, %s7
  $region1: #{tpu_custom_call.1} parent=0
    #allocation2 [shape = 'u8[16384]{0}', space=vmem, size = 0x4000, scoped, tag = 'input window, operand 0, single buffered']
    #allocation3 [shape = 's32[1]{0}', space=sflag, size = 0x4, scoped, tag = 'scoped memory for tpu_custom_call.1']
    #allocation4 [shape = 's32[1]{0}', space=sflag, size = 0x4, scoped, tag = 'scoped memory for tpu_custom_call.1']
    #allocation5 [shape = 'u8[512]{0}', space=vmem, size = 0x400, scoped, tag = 'input window, operand 1, single buffered']
    #allocation6 [shape = 's32[1]{0}', space=sflag, size = 0x4, scoped, tag = 'scoped memory for tpu_custom_call.1']
    #allocation7 [shape = 'u8[196608]{0}', space=vmem, size = 0x30000, scoped, tag = 'input window, operand 3, single buffered']
    #allocation8 [shape = 'u8[196608]{0}', space=vmem, size = 0x30000, scoped, tag = 'input window, operand 5, single buffered']
    #allocation9 [shape = 's32[1]{0}', space=sflag, size = 0x4, scoped, tag = 'scoped memory for tpu_custom_call.1']
    #allocation10 [shape = 'u8[16384]{0}', space=vmem, size = 0x4000, scoped, tag = 'output window, operand 0, single buffered']
    %11 = vsyncpa [#allocation3], 0
    %12 = vsyncpa [#allocation6], 0
    %13 = vsyncpa [#allocation9], 0
    %14 = vsyncpa [#allocation4], 0
    // Predicated region
    $region2: #{tpu_custom_call.1} parent=1 // pred_check
      _
    $region3: #{tpu_custom_call.1} parent=1 // pred_check_branch
      %16 = sbr.rel (0) target = $region5
    $region4: #{tpu_custom_call.1} parent=1 // pred_region
      %18 = vsyncadd [#allocation3], 0
      %s19 = sshll.u32 %s0, 4
      %s20 = int_to_ptr.hbm [resolvable:$true] %s19
      %s21 = sshll.u32 [#allocation2], 4
      %s22 = int_to_ptr.vmem [resolvable:$true] %s21
      %27 = dma.hbm_to_vmem [thread:$0]  %s20, 512, %s22, [#allocation3], 128, 128, 8
    $region5: #{tpu_custom_call.1} parent=1 // pred_fallthru
      _
    // Predicated region
    $region6: #{tpu_custom_call.1} parent=1 // pred_check
      _
    $region7: #{tpu_custom_call.1} parent=1 // pred_check_branch
      %29 = sbr.rel (0) target = $region9
    $region8: #{tpu_custom_call.1} parent=1 // pred_region
      %31 = vsyncadd [#allocation6], 0
      %s33 = sshll.u32 %s1, 4
      %s34 = int_to_ptr.hbm [resolvable:$true] %s33
      %s35 = sshll.u32 [#allocation5], 4
      %s36 = int_to_ptr.vmem [resolvable:$true] %s35
      %38 = dma.hbm_to_vmem [thread:$0]  %s34, 16, %s36, [#allocation6]
    $region9: #{tpu_custom_call.1} parent=1 // pred_fallthru
      _
    // Predicated region
    $region10: #{tpu_custom_call.1} parent=1 // pred_check
      _
    $region11: #{tpu_custom_call.1} parent=1 // pred_check_branch
      %40 = sbr.rel (0) target = $region13
    $region12: #{tpu_custom_call.1} parent=1 // pred_region
      _
    $region13: #{tpu_custom_call.1} parent=1 // pred_fallthru
      _
    // Predicated region
    $region14: #{tpu_custom_call.1} parent=1 // pred_check
      _
    $region15: #{tpu_custom_call.1} parent=1 // pred_check_branch
      %42 = sbr.rel (0) target = $region17
    $region16: #{tpu_custom_call.1} parent=1 // pred_region
      %44 = vsyncadd [#allocation6], 0
      %s45 = sshll.u32 %s3, 4
      %s46 = int_to_ptr.hbm [resolvable:$true] %s45
      %s47 = sshll.u32 [#allocation7], 4
      %s48 = int_to_ptr.vmem [resolvable:$true] %s47
      %53 = dma.hbm_to_vmem [thread:$0]  %s46, 6144, %s48, [#allocation6], 128, 128, 8
    $region17: #{tpu_custom_call.1} parent=1 // pred_fallthru
      _
    // Predicated region
    $region18: #{tpu_custom_call.1} parent=1 // pred_check
      _
    $region19: #{tpu_custom_call.1} parent=1 // pred_check_branch
      %55 = sbr.rel (0) target = $region21
    $region20: #{tpu_custom_call.1} parent=1 // pred_region
      _
    $region21: #{tpu_custom_call.1} parent=1 // pred_fallthru
      _
    // Predicated region
    $region22: #{tpu_custom_call.1} parent=1 // pred_check
      _
    $region23: #{tpu_custom_call.1} parent=1 // pred_check_branch
      %57 = sbr.rel (0) target = $region25
    $region24: #{tpu_custom_call.1} parent=1 // pred_region
      %59 = vsyncadd [#allocation9], 0
      %s60 = sshll.u32 %s5, 4
      %s61 = int_to_ptr.hbm [resolvable:$true] %s60
      %s62 = sshll.u32 [#allocation8], 4
      %s63 = int_to_ptr.vmem [resolvable:$true] %s62
      %68 = dma.hbm_to_vmem [thread:$0]  %s61, 6144, %s63, [#allocation9], 128, 128, 8
    $region25: #{tpu_custom_call.1} parent=1 // pred_fallthru
      _
    // Predicated region
    $region26: #{tpu_custom_call.1} parent=1 // pred_check
      _
    $region27: #{tpu_custom_call.1} parent=1 // pred_check_branch
      %70 = sbr.rel (0) target = $region29
    $region28: #{tpu_custom_call.1} parent=1 // pred_region
      %72 = dma.done [#allocation3], 512
    $region29: #{tpu_custom_call.1} parent=1 // pred_fallthru
      _
    // Predicated region
    $region30: #{tpu_custom_call.1} parent=1 // pred_check
      _
    $region31: #{tpu_custom_call.1} parent=1 // pred_check_branch
      %74 = sbr.rel (0) target = $region33
    $region32: #{tpu_custom_call.1} parent=1 // pred_region
      %76 = dma.done [#allocation6], 16
    $region33: #{tpu_custom_call.1} parent=1 // pred_fallthru
      _
    // Predicated region
    $region34: #{tpu_custom_call.1} parent=1 // pred_check
      _
    $region35: #{tpu_custom_call.1} parent=1 // pred_check_branch
      %78 = sbr.rel (0) target = $region37
    $region36: #{tpu_custom_call.1} parent=1 // pred_region
      %80 = dma.done [#allocation6], 6144
    $region37: #{tpu_custom_call.1} parent=1 // pred_fallthru
      _
    // Predicated region
    $region38: #{tpu_custom_call.1} parent=1 // pred_check
      _
    $region39: #{tpu_custom_call.1} parent=1 // pred_check_branch
      %82 = sbr.rel (0) target = $region41
    $region40: #{tpu_custom_call.1} parent=1 // pred_region
      %84 = dma.done [#allocation9], 6144
    $region41: #{tpu_custom_call.1} parent=1 // pred_fallthru
      _
    %v85 = vld [vmem:[#allocation2] sm:$0xff]
    %v86 = vld [vmem:[#allocation2 + $0x8] sm:$0xff]
    %v87 = vld [vmem:[#allocation2 + $0x10] sm:$0xff]
    %v88 = vld [vmem:[#allocation2 + $0x18] sm:$0xff]
    %v89 = vld [vmem:[#allocation5] sm:$0x1]
    %v91 = vperm.slane %v89, 0
    %v93 = vmul.f32 %v85, %v91
    %v94 = vmul.f32 %v86, %v91
    %v95 = vmul.f32 %v87, %v91
    %v96 = vmul.f32 %v88, %v91
    %v97 = vld [vmem:[%s2] sm:$0x1]
    %v99 = vperm.slane %v97, 0
    %v101 = vadd.f32 %v93, %v99
    %v102 = vadd.f32 %v94, %v99
    %v103 = vadd.f32 %v95, %v99
    %v104 = vadd.f32 %v96, %v99
    %v105 = vmax.f32 %v101, 0.0
    %v106 = vmax.f32 %v102, 0.0
    %v107 = vmax.f32 %v103, 0.0
    %v108 = vmax.f32 %v104, 0.0
    %v109 = vlaneseq
    %v110 = vshrl.u32 %v109, 7
    %v111 = vadd.s32 %v110, 8
    %v112 = vadd.s32 %v110, 16
    %v113 = vadd.s32 %v110, 24
    %vm114 = vcmp.lt.s32.totalorder %v110, 0
    %v115 = vsub.s32 0, %v110
    %v116 = vsel %vm114, %v115, %v110
    %v117 = vshrl.u32 %v116, 4
    %v118 = vand.u32 %v116, 15
    %v119 = vsub.s32 0, %v118
    %v120 = vsel %vm114, %v119, %v118
    %vm121 = vcmp.lt.s32.totalorder %v111, 0
    %v122 = vsub.s32 0, %v111
    %v123 = vsel %vm121, %v122, %v111
    %v124 = vshrl.u32 %v123, 4
    %v125 = vand.u32 %v123, 15
    %v126 = vsub.s32 0, %v125
    %v127 = vsel %vm121, %v126, %v125
    %vm128 = vcmp.lt.s32.totalorder %v112, 0
    %v129 = vsub.s32 0, %v112
    %v130 = vsel %vm128, %v129, %v112
    %v131 = vshrl.u32 %v130, 4
    %v132 = vand.u32 %v130, 15
    %v133 = vsub.s32 0, %v132
    %v134 = vsel %vm128, %v133, %v132
    %vm135 = vcmp.lt.s32.totalorder %v113, 0
    %v136 = vsub.s32 0, %v113
    %v137 = vsel %vm135, %v136, %v113
    %v138 = vshrl.u32 %v137, 4
    %v139 = vand.u32 %v137, 15
    %v140 = vsub.s32 0, %v139
    %v141 = vsel %vm135, %v140, %v139
    %vm142 = vcmp.ne.s32.totalorder %v120, 0
    %vm143 = vcmp.ne.s32.totalorder %v127, 0
    %vm144 = vcmp.ne.s32.totalorder %v134, 0
    %vm145 = vcmp.ne.s32.totalorder %v141, 0
    %vm146 = vcmp.lt.s32.totalorder %v120, 0
    %vm147 = vcmp.lt.s32.totalorder %v127, 0
    %vm148 = vcmp.lt.s32.totalorder %v134, 0
    %vm149 = vcmp.lt.s32.totalorder %v141, 0
    %vm150 = vmand %vm146, %vm142
    %vm151 = vmand %vm147, %vm143
    %vm152 = vmand %vm148, %vm144
    %vm153 = vmand %vm149, %vm145
    %v154 = vadd.s32 %v120, 16
    %v155 = vadd.s32 %v127, 16
    %v156 = vadd.s32 %v134, 16
    %v157 = vadd.s32 %v141, 16
    %v158 = vsel %vm150, %v154, %v120
    %v159 = vsel %vm151, %v155, %v127
    %v160 = vsel %vm152, %v156, %v134
    %v161 = vsel %vm153, %v157, %v141
    %vm162 = vcmp.eq.s32.totalorder %v158, 0
    %vm163 = vcmp.eq.s32.totalorder %v159, 0
    %vm164 = vcmp.eq.s32.totalorder %v160, 0
    %vm165 = vcmp.eq.s32.totalorder %v161, 0
    %vm166 = vcmp.eq.s32.totalorder %v158, 15
    %vm167 = vcmp.eq.s32.totalorder %v159, 15
    %vm168 = vcmp.eq.s32.totalorder %v160, 15
    %vm169 = vcmp.eq.s32.totalorder %v161, 15
    %v170 = vrot.slane %v105, 7
    %v171 = vrot.slane %v106, 7
    %v172 = vrot.slane %v107, 7
    %v173 = vrot.slane %v108, 7
    %vm174 = vcmp.lt.s32.totalorder %v110, 1
    %v175 = vsel %vm174, %v172, %v173
    %v176 = vsel %vm174, %v171, %v172
    %v177 = vsel %vm174, %v170, %v171
    %v178 = vsel %vm174, %v173, %v170
    %v179 = vsel %vm162, 0.0, %v178
    %v180 = vsel %vm163, 0.0, %v177
    %v181 = vsel %vm164, 0.0, %v176
    %v182 = vsel %vm165, 0.0, %v175
    %v183 = vrot.slane %v105, 1
    %v184 = vrot.slane %v106, 1
    %v185 = vrot.slane %v107, 1
    %v186 = vrot.slane %v108, 1
    %vm187 = vcmp.lt.s32.totalorder %v110, 7
    %v188 = vsel %vm187, %v185, %v186
    %v189 = vsel %vm187, %v184, %v185
    %v190 = vsel %vm187, %v183, %v184
    %v191 = vsel %vm187, %v186, %v183
    %v192 = vsel %vm166, 0.0, %v190
    %v193 = vsel %vm167, 0.0, %v189
    %v194 = vsel %vm168, 0.0, %v188
    %v195 = vsel %vm169, 0.0, %v191
    %v196 = vld [vmem:[#allocation7] sm:$0xff]
    %v197 = vld [vmem:[#allocation7 + $0x8] sm:$0xff]
    %v198 = vld [vmem:[#allocation7 + $0x10] sm:$0xff]
    %v199 = vld [vmem:[#allocation7 + $0x18] sm:$0xff]
    %v200 = vld [vmem:[#allocation7 + $0x20] sm:$0xff]
    %v201 = vld [vmem:[#allocation7 + $0x28] sm:$0xff]
    %v202 = vld [vmem:[#allocation7 + $0x30] sm:$0xff]
    %v203 = vld [vmem:[#allocation7 + $0x38] sm:$0xff]
    %v204 = vld [vmem:[#allocation7 + $0x40] sm:$0xff]
    %v205 = vld [vmem:[#allocation7 + $0x48] sm:$0xff]
    %v206 = vld [vmem:[#allocation7 + $0x50] sm:$0xff]
    %v207 = vld [vmem:[#allocation7 + $0x58] sm:$0xff]
    %v208 = vld [vmem:[#allocation7 + $0x60] sm:$0xff]
    %v209 = vld [vmem:[#allocation7 + $0x68] sm:$0xff]
    %v210 = vld [vmem:[#allocation7 + $0x70] sm:$0xff]
    %v211 = vld [vmem:[#allocation7 + $0x78] sm:$0xff]
    %v212 = vld [vmem:[#allocation7 + $0x80] sm:$0xff]
    %v213 = vld [vmem:[#allocation7 + $0x88] sm:$0xff]
    %v214 = vld [vmem:[#allocation7 + $0x90] sm:$0xff]
    %v215 = vld [vmem:[#allocation7 + $0x98] sm:$0xff]
    %v216 = vld [vmem:[#allocation7 + $0xa0] sm:$0xff]
    %v217 = vld [vmem:[#allocation7 + $0xa8] sm:$0xff]
    %v218 = vld [vmem:[#allocation7 + $0xb0] sm:$0xff]
    %v219 = vld [vmem:[#allocation7 + $0xb8] sm:$0xff]
    %v220 = vld [vmem:[#allocation7 + $0xc0] sm:$0xff]
    %v221 = vld [vmem:[#allocation7 + $0xc8] sm:$0xff]
    %v222 = vld [vmem:[#allocation7 + $0xd0] sm:$0xff]
    %v223 = vld [vmem:[#allocation7 + $0xd8] sm:$0xff]
    %v224 = vld [vmem:[#allocation7 + $0xe0] sm:$0xff]
    %v225 = vld [vmem:[#allocation7 + $0xe8] sm:$0xff]
    %v226 = vld [vmem:[#allocation7 + $0xf0] sm:$0xff]
    %v227 = vld [vmem:[#allocation7 + $0xf8] sm:$0xff]
    %v228 = vld [vmem:[#allocation7 + $0x100] sm:$0xff]
    %v229 = vld [vmem:[#allocation7 + $0x108] sm:$0xff]
    %v230 = vld [vmem:[#allocation7 + $0x110] sm:$0xff]
    %v231 = vld [vmem:[#allocation7 + $0x118] sm:$0xff]
    %v232 = vld [vmem:[#allocation7 + $0x120] sm:$0xff]
    %v233 = vld [vmem:[#allocation7 + $0x128] sm:$0xff]
    %v234 = vld [vmem:[#allocation7 + $0x130] sm:$0xff]
    %v235 = vld [vmem:[#allocation7 + $0x138] sm:$0xff]
    %v236 = vld [vmem:[#allocation7 + $0x140] sm:$0xff]
    %v237 = vld [vmem:[#allocation7 + $0x148] sm:$0xff]
    %v238 = vld [vmem:[#allocation7 + $0x150] sm:$0xff]
    %v239 = vld [vmem:[#allocation7 + $0x158] sm:$0xff]
    %v240 = vld [vmem:[#allocation7 + $0x160] sm:$0xff]
    %v241 = vld [vmem:[#allocation7 + $0x168] sm:$0xff]
    %v242 = vld [vmem:[#allocation7 + $0x170] sm:$0xff]
    %v243 = vld [vmem:[#allocation7 + $0x178] sm:$0xff]
    %v244 = vld [vmem:[%s4] sm:$0x1]
    %v246 = vperm.slane %v244, 0
    %248 = vmatpush.msra.mxu0 %v211
    %249 = vmatpush.msra.mxu0 %v210
    %250 = vmatpush.msra.mxu0 %v209
    %251 = vmatpush.msra.mxu0 %v208
    %252 = vmatpush.msra.mxu0 %v207
    %253 = vmatpush.msra.mxu0 %v206
    %254 = vmatpush.msra.mxu0 %v205
    %255 = vmatpush.msra.mxu0 %v204
    %256 = vmatpush.msra.mxu0 %v203
    %257 = vmatpush.msra.mxu0 %v202
    %258 = vmatpush.msra.mxu0 %v201
    %259 = vmatpush.msra.mxu0 %v200
    %260 = vmatpush.msra.mxu0 %v199
    %261 = vmatpush.msra.mxu0 %v198
    %262 = vmatpush.msra.mxu0 %v197
    %263 = vmatpush.msra.mxu0 %v196
    %264 = vmatmul.f32.gmra.mxu0 %v179
    %v265 = vpop.f32.mrf.mxu0
    %v266 = vadd.f32 %v246, %v265
    %267 = vmatmul.f32.gmra.mxu0 %v180
    %v268 = vpop.f32.mrf.mxu0
    %v269 = vadd.f32 %v246, %v268
    %270 = vmatmul.f32.gmra.mxu0 %v181
    %v271 = vpop.f32.mrf.mxu0
    %v272 = vadd.f32 %v246, %v271
    %273 = vmatmul.f32.gmra.mxu0 %v182
    %v274 = vpop.f32.mrf.mxu0
    %v275 = vadd.f32 %v246, %v274
    %276 = vdwg.mxu0
    %277 = vmatpush.msra.mxu0 %v227
    %278 = vmatpush.msra.mxu0 %v226
    %279 = vmatpush.msra.mxu0 %v225
    %280 = vmatpush.msra.mxu0 %v224
    %281 = vmatpush.msra.mxu0 %v223
    %282 = vmatpush.msra.mxu0 %v222
    %283 = vmatpush.msra.mxu0 %v221
    %284 = vmatpush.msra.mxu0 %v220
    %285 = vmatpush.msra.mxu0 %v219
    %286 = vmatpush.msra.mxu0 %v218
    %287 = vmatpush.msra.mxu0 %v217
    %288 = vmatpush.msra.mxu0 %v216
    %289 = vmatpush.msra.mxu0 %v215
    %290 = vmatpush.msra.mxu0 %v214
    %291 = vmatpush.msra.mxu0 %v213
    %292 = vmatpush.msra.mxu0 %v212
    %293 = vmatmul.f32.gmra.mxu0 %v105
    %v294 = vpop.f32.mrf.mxu0
    %v295 = vadd.f32 %v266, %v294
    %296 = vmatmul.f32.gmra.mxu0 %v106
    %v297 = vpop.f32.mrf.mxu0
    %v298 = vadd.f32 %v269, %v297
    %299 = vmatmul.f32.gmra.mxu0 %v107
    %v300 = vpop.f32.mrf.mxu0
    %v301 = vadd.f32 %v272, %v300
    %302 = vmatmul.f32.gmra.mxu0 %v108
    %v303 = vpop.f32.mrf.mxu0
    %v304 = vadd.f32 %v275, %v303
    %305 = vdwg.mxu0
    %306 = vmatpush.msra.mxu0 %v243
    %307 = vmatpush.msra.mxu0 %v242
    %308 = vmatpush.msra.mxu0 %v241
    %309 = vmatpush.msra.mxu0 %v240
    %310 = vmatpush.msra.mxu0 %v239
    %311 = vmatpush.msra.mxu0 %v238
    %312 = vmatpush.msra.mxu0 %v237
    %313 = vmatpush.msra.mxu0 %v236
    %314 = vmatpush.msra.mxu0 %v235
    %315 = vmatpush.msra.mxu0 %v234
    %316 = vmatpush.msra.mxu0 %v233
    %317 = vmatpush.msra.mxu0 %v232
    %318 = vmatpush.msra.mxu0 %v231
    %319 = vmatpush.msra.mxu0 %v230
    %320 = vmatpush.msra.mxu0 %v229
    %321 = vmatpush.msra.mxu0 %v228
    %322 = vmatmul.f32.gmra.mxu0 %v192
    %v323 = vpop.f32.mrf.mxu0
    %v324 = vadd.f32 %v295, %v323
    %325 = vmatmul.f32.gmra.mxu0 %v193
    %v326 = vpop.f32.mrf.mxu0
    %v327 = vadd.f32 %v298, %v326
    %328 = vmatmul.f32.gmra.mxu0 %v194
    %v329 = vpop.f32.mrf.mxu0
    %v330 = vadd.f32 %v301, %v329
    %331 = vmatmul.f32.gmra.mxu0 %v195
    %v332 = vpop.f32.mrf.mxu0
    %v333 = vadd.f32 %v304, %v332
    %334 = vdwg.mxu0
    %v335 = vmax.f32 %v324, 0.0
    %v336 = vmax.f32 %v327, 0.0
    %v337 = vmax.f32 %v330, 0.0
    %v338 = vmax.f32 %v333, 0.0
    %v339 = vrot.slane %v335, 7
    %v340 = vrot.slane %v336, 7
    %v341 = vrot.slane %v337, 7
    %v342 = vrot.slane %v338, 7
    %v343 = vsel %vm174, %v341, %v342
    %v344 = vsel %vm174, %v340, %v341
    %v345 = vsel %vm174, %v339, %v340
    %v346 = vsel %vm174, %v342, %v339
    %v347 = vsel %vm162, 0.0, %v346
    %v348 = vsel %vm163, 0.0, %v345
    %v349 = vsel %vm164, 0.0, %v344
    %v350 = vsel %vm165, 0.0, %v343
    %v351 = vrot.slane %v335, 1
    %v352 = vrot.slane %v336, 1
    %v353 = vrot.slane %v337, 1
    %v354 = vrot.slane %v338, 1
    %v355 = vsel %vm187, %v353, %v354
    %v356 = vsel %vm187, %v352, %v353
    %v357 = vsel %vm187, %v351, %v352
    %v358 = vsel %vm187, %v354, %v351
    %v359 = vsel %vm166, 0.0, %v357
    %v360 = vsel %vm167, 0.0, %v356
    %v361 = vsel %vm168, 0.0, %v355
    %v362 = vsel %vm169, 0.0, %v358
    %v363 = vld [vmem:[#allocation8] sm:$0xff]
    %v364 = vld [vmem:[#allocation8 + $0x8] sm:$0xff]
    %v365 = vld [vmem:[#allocation8 + $0x10] sm:$0xff]
    %v366 = vld [vmem:[#allocation8 + $0x18] sm:$0xff]
    %v367 = vld [vmem:[#allocation8 + $0x20] sm:$0xff]
    %v368 = vld [vmem:[#allocation8 + $0x28] sm:$0xff]
    %v369 = vld [vmem:[#allocation8 + $0x30] sm:$0xff]
    %v370 = vld [vmem:[#allocation8 + $0x38] sm:$0xff]
    %v371 = vld [vmem:[#allocation8 + $0x40] sm:$0xff]
    %v372 = vld [vmem:[#allocation8 + $0x48] sm:$0xff]
    %v373 = vld [vmem:[#allocation8 + $0x50] sm:$0xff]
    %v374 = vld [vmem:[#allocation8 + $0x58] sm:$0xff]
    %v375 = vld [vmem:[#allocation8 + $0x60] sm:$0xff]
    %v376 = vld [vmem:[#allocation8 + $0x68] sm:$0xff]
    %v377 = vld [vmem:[#allocation8 + $0x70] sm:$0xff]
    %v378 = vld [vmem:[#allocation8 + $0x78] sm:$0xff]
    %v379 = vld [vmem:[#allocation8 + $0x80] sm:$0xff]
    %v380 = vld [vmem:[#allocation8 + $0x88] sm:$0xff]
    %v381 = vld [vmem:[#allocation8 + $0x90] sm:$0xff]
    %v382 = vld [vmem:[#allocation8 + $0x98] sm:$0xff]
    %v383 = vld [vmem:[#allocation8 + $0xa0] sm:$0xff]
    %v384 = vld [vmem:[#allocation8 + $0xa8] sm:$0xff]
    %v385 = vld [vmem:[#allocation8 + $0xb0] sm:$0xff]
    %v386 = vld [vmem:[#allocation8 + $0xb8] sm:$0xff]
    %v387 = vld [vmem:[#allocation8 + $0xc0] sm:$0xff]
    %v388 = vld [vmem:[#allocation8 + $0xc8] sm:$0xff]
    %v389 = vld [vmem:[#allocation8 + $0xd0] sm:$0xff]
    %v390 = vld [vmem:[#allocation8 + $0xd8] sm:$0xff]
    %v391 = vld [vmem:[#allocation8 + $0xe0] sm:$0xff]
    %v392 = vld [vmem:[#allocation8 + $0xe8] sm:$0xff]
    %v393 = vld [vmem:[#allocation8 + $0xf0] sm:$0xff]
    %v394 = vld [vmem:[#allocation8 + $0xf8] sm:$0xff]
    %v395 = vld [vmem:[#allocation8 + $0x100] sm:$0xff]
    %v396 = vld [vmem:[#allocation8 + $0x108] sm:$0xff]
    %v397 = vld [vmem:[#allocation8 + $0x110] sm:$0xff]
    %v398 = vld [vmem:[#allocation8 + $0x118] sm:$0xff]
    %v399 = vld [vmem:[#allocation8 + $0x120] sm:$0xff]
    %v400 = vld [vmem:[#allocation8 + $0x128] sm:$0xff]
    %v401 = vld [vmem:[#allocation8 + $0x130] sm:$0xff]
    %v402 = vld [vmem:[#allocation8 + $0x138] sm:$0xff]
    %v403 = vld [vmem:[#allocation8 + $0x140] sm:$0xff]
    %v404 = vld [vmem:[#allocation8 + $0x148] sm:$0xff]
    %v405 = vld [vmem:[#allocation8 + $0x150] sm:$0xff]
    %v406 = vld [vmem:[#allocation8 + $0x158] sm:$0xff]
    %v407 = vld [vmem:[#allocation8 + $0x160] sm:$0xff]
    %v408 = vld [vmem:[#allocation8 + $0x168] sm:$0xff]
    %v409 = vld [vmem:[#allocation8 + $0x170] sm:$0xff]
    %v410 = vld [vmem:[#allocation8 + $0x178] sm:$0xff]
    %411 = vmatpush.msra.mxu0 %v378
    %412 = vmatpush.msra.mxu0 %v377
    %413 = vmatpush.msra.mxu0 %v376
    %414 = vmatpush.msra.mxu0 %v375
    %415 = vmatpush.msra.mxu0 %v374
    %416 = vmatpush.msra.mxu0 %v373
    %417 = vmatpush.msra.mxu0 %v372
    %418 = vmatpush.msra.mxu0 %v371
    %419 = vmatpush.msra.mxu0 %v370
    %420 = vmatpush.msra.mxu0 %v369
    %421 = vmatpush.msra.mxu0 %v368
    %422 = vmatpush.msra.mxu0 %v367
    %423 = vmatpush.msra.mxu0 %v366
    %424 = vmatpush.msra.mxu0 %v365
    %425 = vmatpush.msra.mxu0 %v364
    %426 = vmatpush.msra.mxu0 %v363
    %427 = vmatmul.f32.gmra.mxu0 %v347
    %v428 = vpop.f32.mrf.mxu0
    %v429 = vadd.f32 %v85, %v428
    %430 = vmatmul.f32.gmra.mxu0 %v348
    %v431 = vpop.f32.mrf.mxu0
    %v432 = vadd.f32 %v86, %v431
    %433 = vmatmul.f32.gmra.mxu0 %v349
    %v434 = vpop.f32.mrf.mxu0
    %v435 = vadd.f32 %v87, %v434
    %436 = vmatmul.f32.gmra.mxu0 %v350
    %v437 = vpop.f32.mrf.mxu0
    %v438 = vadd.f32 %v88, %v437
    %439 = vdwg.mxu0
    %440 = vmatpush.msra.mxu0 %v394
    %441 = vmatpush.msra.mxu0 %v393
    %442 = vmatpush.msra.mxu0 %v392
    %443 = vmatpush.msra.mxu0 %v391
    %444 = vmatpush.msra.mxu0 %v390
    %445 = vmatpush.msra.mxu0 %v389
    %446 = vmatpush.msra.mxu0 %v388
    %447 = vmatpush.msra.mxu0 %v387
    %448 = vmatpush.msra.mxu0 %v386
    %449 = vmatpush.msra.mxu0 %v385
    %450 = vmatpush.msra.mxu0 %v384
    %451 = vmatpush.msra.mxu0 %v383
    %452 = vmatpush.msra.mxu0 %v382
    %453 = vmatpush.msra.mxu0 %v381
    %454 = vmatpush.msra.mxu0 %v380
    %455 = vmatpush.msra.mxu0 %v379
    %456 = vmatmul.f32.gmra.mxu0 %v335
    %v457 = vpop.f32.mrf.mxu0
    %v458 = vadd.f32 %v429, %v457
    %459 = vmatmul.f32.gmra.mxu0 %v336
    %v460 = vpop.f32.mrf.mxu0
    %v461 = vadd.f32 %v432, %v460
    %462 = vmatmul.f32.gmra.mxu0 %v337
    %v463 = vpop.f32.mrf.mxu0
    %v464 = vadd.f32 %v435, %v463
    %465 = vmatmul.f32.gmra.mxu0 %v338
    %v466 = vpop.f32.mrf.mxu0
    %v467 = vadd.f32 %v438, %v466
    %468 = vdwg.mxu0
    %469 = vmatpush.msra.mxu0 %v410
    %470 = vmatpush.msra.mxu0 %v409
    %471 = vmatpush.msra.mxu0 %v408
    %472 = vmatpush.msra.mxu0 %v407
    %473 = vmatpush.msra.mxu0 %v406
    %474 = vmatpush.msra.mxu0 %v405
    %475 = vmatpush.msra.mxu0 %v404
    %476 = vmatpush.msra.mxu0 %v403
    %477 = vmatpush.msra.mxu0 %v402
    %478 = vmatpush.msra.mxu0 %v401
    %479 = vmatpush.msra.mxu0 %v400
    %480 = vmatpush.msra.mxu0 %v399
    %481 = vmatpush.msra.mxu0 %v398
    %482 = vmatpush.msra.mxu0 %v397
    %483 = vmatpush.msra.mxu0 %v396
    %484 = vmatpush.msra.mxu0 %v395
    %485 = vmatmul.f32.gmra.mxu0 %v359
    %v486 = vpop.f32.mrf.mxu0
    %v487 = vadd.f32 %v458, %v486
    %488 = vmatmul.f32.gmra.mxu0 %v360
    %v489 = vpop.f32.mrf.mxu0
    %v490 = vadd.f32 %v461, %v489
    %491 = vmatmul.f32.gmra.mxu0 %v361
    %v492 = vpop.f32.mrf.mxu0
    %v493 = vadd.f32 %v464, %v492
    %494 = vmatmul.f32.gmra.mxu0 %v362
    %v495 = vpop.f32.mrf.mxu0
    %v496 = vadd.f32 %v467, %v495
    %497 = vdwg.mxu0
    %498 = vst [vmem:[#allocation10] sm:$0xff] %v487
    %499 = vst [vmem:[#allocation10 + $0x8] sm:$0xff] %v490
    %500 = vst [vmem:[#allocation10 + $0x10] sm:$0xff] %v493
    %501 = vst [vmem:[#allocation10 + $0x18] sm:$0xff] %v496
    // Predicated region
    $region42: #{tpu_custom_call.1} parent=1 // pred_check
      _
    $region43: #{tpu_custom_call.1} parent=1 // pred_check_branch
      %503 = sbr.rel (0) target = $region45
    $region44: #{tpu_custom_call.1} parent=1 // pred_region
      %505 = vsyncadd [#allocation4], 0
      %s506 = sshll.u32 [#allocation10], 4
      %s507 = int_to_ptr.vmem [resolvable:$true] %s506
      %s508 = sshll.u32 %s6, 4
      %s509 = int_to_ptr.hbm [resolvable:$true] %s508
      %514 = dma.vmem_to_hbm [thread:$0]  %s507, 512, %s509, [#allocation4], 128, 128, 8
    $region45: #{tpu_custom_call.1} parent=1 // pred_fallthru
      _
    // Predicated region
    $region46: #{tpu_custom_call.1} parent=1 // pred_check
      _
    $region47: #{tpu_custom_call.1} parent=1 // pred_check_branch
      %516 = sbr.rel (0) target = $region49
    $region48: #{tpu_custom_call.1} parent=1 // pred_region
      %518 = dma.done [#allocation4], 512
    $region49: #{tpu_custom_call.1} parent=1 // pred_fallthru
      _
    %519 = vsyncpa [#allocation3], 1
    %520 = vsyncpa [#allocation6], 1
    %521 = vsyncpa [#allocation9], 1
    %522 = vsyncpa [#allocation4], 1

</llo_original>
